<compile_context>
chip_gen: v7x
topology: tpu7x:2x2x1
jax: 0.10.0
libtpu: 0.0.40
codegen_flags: <defaults>
</compile_context>

<pallas_src>
import functools
import math

import jax
import jax.numpy as jnp
import numpy as np
from jax.experimental import pallas as pl
from jax.experimental.pallas import tpu as pltpu


# ----------------------------------------------------------------------------
# Host-side construction of the (small, dense) linear operators encoding
# bilinear upsampling, reflection padding and the conv taps.
# ----------------------------------------------------------------------------

def _bilinear_matrix(in_size, out_size):
    """(out_size, in_size) matrix for F.interpolate(bilinear, align_corners=False)."""
    if in_size == out_size:
        return np.eye(out_size, dtype=np.float32)
    s = (np.arange(out_size, dtype=np.float64) + 0.5) * (in_size / out_size) - 0.5
    s = np.maximum(s, 0.0)
    i0 = np.minimum(np.floor(s).astype(np.int64), in_size - 1)
    i1 = np.minimum(i0 + 1, in_size - 1)
    f = (s - i0).astype(np.float32)
    m = np.zeros((out_size, in_size), dtype=np.float32)
    m[np.arange(out_size), i0] += 1.0 - f
    m[np.arange(out_size), i1] += f
    return m


def _reflect_indices(size, pad0, pad1):
    """ReflectionPad index map: padded index -> source index (pads < size)."""
    idx = np.arange(-pad0, size + pad1)
    idx = np.where(idx < 0, -idx, idx)
    idx = np.where(idx >= size, 2 * size - 2 - idx, idx)
    return idx.astype(np.int64)


def _build_operators(h, w, cin, cout, kernel_size, stride, upsample, weight_hwio):
    """Returns (A_full (HP,H), C (KH, W*CIN, WO*COUT), (hu, wu, hp, wp, ho, wo))."""
    kh = kw = kernel_size
    pad0 = (kernel_size - 1) // 2
    pad1 = kernel_size - 1 - pad0

    if upsample:
        hu = int(math.floor(h * upsample))
        wu = int(math.floor(w * upsample))
    else:
        hu, wu = h, w

    u_row = _bilinear_matrix(h, hu)                       # (HU, H)
    u_col = _bilinear_matrix(w, wu)                       # (WU, W)

    hp = hu + pad0 + pad1
    wp = wu + pad0 + pad1
    a_full = u_row[_reflect_indices(hu, pad0, pad1), :]   # (HP, H)  rows of padded img
    b_full = u_col[_reflect_indices(wu, pad0, pad1), :]   # (WP, W)  cols of padded img

    ho = (hp - kh) // stride + 1
    wo = (wp - kw) // stride + 1

    wgt = np.asarray(weight_hwio, dtype=np.float32)       # (KH, KW, CIN, COUT)
    c_mat = np.zeros((kh, w * cin, wo * cout), dtype=np.float32)
    for dy in range(kh):
        # b_sh[dx, o, w] = B[o*stride + dx, w]
        b_sh = np.stack(
            [b_full[dx: dx + (wo - 1) * stride + 1: stride, :] for dx in range(kw)],
            axis=0,
        )                                                  # (KW, WO, W)
        tmp = np.einsum("dow,dic->wioc", b_sh, wgt[dy])    # (W, CIN, WO, COUT)
        c_mat[dy] = tmp.reshape(w * cin, wo * cout)
    return a_full, c_mat, (hu, wu, hp, wp, ho, wo)


def _pick_row_tile(ho):
    """Largest multiple-of-8 divisor of HO, <= 128 (no forced multi-tile cap)."""
    best = None
    for th in range(8, min(128, ho) + 1, 8):
        if ho % th == 0:
            best = th
    return best if best is not None else ho


# ----------------------------------------------------------------------------
# Fused Pallas kernel: upsample + reflection pad + conv + bias per row tile.
# ----------------------------------------------------------------------------

def _fused_kernel(x_ref, a_ref, c_ref, b_ref, o_ref, y_ref, *, kh, h):
    # x_ref: (1, H, W*CIN)   bf16   original (small) image, one batch element
    # a_ref: (T, TILE_H, KH*H) f32  row upsample+pad operator, all tiles (constant)
    # c_ref: (KH, W*CIN, WO*COUT) bf16  col upsample+pad+conv operator (constant)
    # b_ref: (1, WO*COUT)    f32    bias tiled over WO (lane-dense)
    # o_ref: (1, TILE_H, WO*COUT)   lane-dense output row tile
    # y_ref: (KH*H, WO*COUT) f32    per-batch hoisted contraction  Y[dy] = x2 @ C[dy]
    i = pl.program_id(1)

    @pl.when(i == 0)
    def _():
        # Hoisted once per batch element: the expensive K = W*CIN contraction.
        x2 = x_ref[0]                                               # (H, WCIN) bf16
        for dy in range(kh):                                        # static, unrolled
            y_ref[pl.ds(dy * h, h), :] = jnp.dot(
                x2, c_ref[dy], preferred_element_type=jnp.float32)

    # One MXU matmul per row tile; accumulation stays in vregs (no scratch).
    a_t = a_ref[i]                                                  # (TILE_H, KH*H)
    acc = jnp.dot(a_t, y_ref[...], preferred_element_type=jnp.float32)
    o_ref[0] = (acc + b_ref[...]).astype(o_ref.dtype)


def upsample_conv_pallas(x2d, a_cat, c_mat, bias_row, *, n, h, ho, wo, cout,
                         kh, tile_h, out_dtype):
    t = ho // tile_h
    wcin = x2d.shape[2]
    wocout = wo * cout

    kernel = functools.partial(_fused_kernel, kh=kh, h=h)

    # VMEM budget: double-buffered input/output blocks + Y scratch.
    # (Constant-index blocks are only DMA'd once by the pipeliner, but still
    #  reserve two buffers; counted as such here.)
    est = (2 * h * wcin * x2d.dtype.itemsize
           + 2 * t * tile_h * kh * h * 4
           + 2 * kh * wcin * wocout * c_mat.dtype.itemsize
           + 2 * wocout * 4
           + 2 * tile_h * wocout * jnp.dtype(out_dtype).itemsize
           + kh * h * wocout * 4)
    try:
        vmem_cap = int(pltpu.get_tpu_info().vmem_capacity_bytes)
    except Exception:
        vmem_cap = 64 * 2 ** 20          # conservative (v7x per-TensorCore)
    vmem_limit = int(min(max(est + (4 << 20), 16 << 20), int(0.7 * vmem_cap)))

    return pl.pallas_call(
        kernel,
        out_shape=jax.ShapeDtypeStruct((n, ho, wocout), out_dtype),
        grid_spec=pltpu.PrefetchScalarGridSpec(
            num_scalar_prefetch=0,
            grid=(n, t),
            in_specs=[
                pl.BlockSpec((1, h, wcin), lambda b, i: (b, 0, 0)),
                pl.BlockSpec((t, tile_h, kh * h), lambda b, i: (0, 0, 0)),
                pl.BlockSpec((kh, wcin, wocout), lambda b, i: (0, 0, 0)),
                pl.BlockSpec((1, wocout), lambda b, i: (0, 0)),
            ],
            out_specs=pl.BlockSpec((1, tile_h, wocout), lambda b, i: (b, i, 0)),
            scratch_shapes=[pltpu.VMEM((kh * h, wocout), jnp.float32)],
        ),
        compiler_params=pltpu.CompilerParams(
            # batch is megacore-parallel; the row-tile axis carries the Y scratch.
            dimension_semantics=("parallel", "arbitrary"),
            vmem_limit_bytes=vmem_limit,
        ),
    )(x2d, a_cat, c_mat, bias_row)


# ------------------------------- module wrapper -------------------------------

class UpsampleConvLayerPallas:
    """Pallas-TPU mirror of the PyTorch UpsampleConvLayer forward pass."""

    def __init__(self, in_channels, out_channels, kernel_size, stride,
                 upsample=None, mode="bilinear", key=None):
        assert mode == "bilinear", "only bilinear mode implemented"
        self.in_channels = in_channels
        self.out_channels = out_channels
        self.kernel_size = kernel_size
        self.stride = stride
        self.upsample = upsample
        self.pad0 = (kernel_size - 1) // 2
        self.pad1 = kernel_size - 1 - self.pad0

        if key is None:
            key = jax.random.PRNGKey(0)
        kw_key, kb_key = jax.random.split(key)
        fan_in = in_channels * kernel_size * kernel_size
        bound = 1.0 / np.sqrt(fan_in)
        self.weight_oihw = jax.random.uniform(
            kw_key, (out_channels, in_channels, kernel_size, kernel_size),
            minval=-bound, maxval=bound, dtype=jnp.float32)
        self.bias = jax.random.uniform(
            kb_key, (out_channels,), minval=-bound, maxval=bound, dtype=jnp.float32)
        self.weight_hwio = jnp.transpose(self.weight_oihw, (2, 3, 1, 0))

        self._cache = {}   # (H, W) -> prepared constant operands

    def _prepare(self, h, w):
        key = (h, w)
        if key in self._cache:
            return self._cache[key]
        cin, cout = self.in_channels, self.out_channels
        kh = self.kernel_size
        a_full, c_mat, dims = _build_operators(
            h, w, cin, cout, kh, self.stride, self.upsample,
            np.asarray(self.weight_hwio))
        _, _, _, _, ho, wo = dims
        tile_h = _pick_row_tile(ho)
        t = ho // tile_h

        # A_cat[t, q, dy*H + hh] = A_full[(t*tile_h + q)*stride + dy, hh]
        # (per-dy row operators pre-concatenated along K -> no in-kernel
        #  sublane-offset or strided slices).
        a_cat = np.zeros((t, tile_h, kh * h), dtype=np.float32)
        for ti in range(t):
            for dy in range(kh):
                start = ti * tile_h * self.stride + dy
                stop = (ti * tile_h + tile_h - 1) * self.stride + dy + 1
                a_cat[ti, :, dy * h:(dy + 1) * h] = a_full[start:stop:self.stride, :]

        bias_row = np.tile(np.asarray(self.bias, np.float32), wo).reshape(1, wo * cout)
        prepared = dict(
            a_cat=jnp.asarray(a_cat, jnp.float32),
            c_mat=jnp.asarray(c_mat, jnp.bfloat16),   # bf16 operand for the MXU
            bias_row=jnp.asarray(bias_row, jnp.float32),
            ho=ho, wo=wo, tile_h=tile_h,
        )
        self._cache[key] = prepared
        return prepared

    def __call__(self, x_nchw):
        n, cin, h, w = x_nchw.shape
        assert cin == self.in_channels
        prep = self._prepare(h, w)
        cout = self.out_channels
        # NCHW -> NHWC -> (N, H, W*CIN): this is the *original* small image
        # (pre-upsample); everything after this (upsample, pad, conv, bias)
        # happens inside the kernel.  bf16 operand for the dominant matmul.
        x2d = (jnp.transpose(x_nchw, (0, 2, 3, 1))
               .reshape(n, h, w * cin).astype(jnp.bfloat16))
        y2d = upsample_conv_pallas(
            x2d, prep["a_cat"], prep["c_mat"], prep["bias_row"],
            n=n, h=h, ho=prep["ho"], wo=prep["wo"], cout=cout,
            kh=self.kernel_size, tile_h=prep["tile_h"], out_dtype=x_nchw.dtype)
        # lane-dense (N, HO, WO*COUT) -> NCHW
        y = y2d.reshape(n, prep["ho"], prep["wo"], cout)
        return jnp.transpose(y, (0, 3, 1, 2))


# ------------------------------------ main ------------------------------------

def _bilinear_upsample_nhwc_ref(x, scale):
    """Pure-JAX reference bilinear upsample (PyTorch align_corners=False)."""
    n, h, w, c = x.shape
    ho, wo = int(math.floor(h * scale)), int(math.floor(w * scale))

    def src_coords(out_size, in_size):
        s = (jnp.arange(out_size, dtype=jnp.float32) + 0.5) * (in_size / out_size) - 0.5
        s = jnp.maximum(s, 0.0)
        i0 = jnp.minimum(jnp.floor(s).astype(jnp.int32), in_size - 1)
        i1 = jnp.minimum(i0 + 1, in_size - 1)
        return i0, i1, s - i0.astype(jnp.float32)

    y0, y1, fy = src_coords(ho, h)
    x0, x1, fx = src_coords(wo, w)
    rows = (x[:, y0] * (1.0 - fy)[None, :, None, None]
            + x[:, y1] * fy[None, :, None, None])
    return (rows[:, :, x0] * (1.0 - fx)[None, None, :, None]
            + rows[:, :, x1] * fx[None, None, :, None])


if __name__ == "__main__":
    key = jax.random.PRNGKey(0)
    x_key, p_key = jax.random.split(key)

    N, CIN, H, W = 2, 4, 16, 16
    COUT, K, STRIDE, UPSAMPLE = 8, 3, 1, 2

    x = jax.random.normal(x_key, (N, CIN, H, W), dtype=jnp.float32)

    layer = UpsampleConvLayerPallas(CIN, COUT, K, STRIDE, upsample=UPSAMPLE,
                                    mode="bilinear", key=p_key)
    out = jax.block_until_ready(layer(x))

    # Pure-JAX f32 reference: upsample -> reflection pad -> conv + bias.
    x_nhwc = jnp.transpose(x, (0, 2, 3, 1))
    x_up = _bilinear_upsample_nhwc_ref(x_nhwc, UPSAMPLE)
    x_pad = jnp.pad(x_up, ((0, 0), (layer.pad0, layer.pad1),
                           (layer.pad0, layer.pad1), (0, 0)), mode="reflect")
    ref = jax.lax.conv_general_dilated(
        x_pad, layer.weight_hwio, window_strides=(STRIDE, STRIDE), padding="VALID",
        dimension_numbers=("NHWC", "HWIO", "NHWC")) + layer.bias[None, None, None, :]
    ref = jnp.transpose(ref, (0, 3, 1, 2))

    assert out.shape == (N, COUT, H * UPSAMPLE, W * UPSAMPLE), out.shape
    # bf16 operands on the dominant matmul -> relaxed tolerance vs the f32 ref.
    np.testing.assert_allclose(np.asarray(out), np.asarray(ref), rtol=2e-2, atol=5e-2)
    print("KERNEL_OK")
</pallas_src>

<mosaic_0001>
module attributes {stable_mosaic.version = 11 : i64} {
  func.func @_fused_kernel(%arg0: i32, %arg1: i32, %arg2: memref<1x16x64xbf16, #tpu.memory_space<vmem>>, %arg3: memref<1x32x48xf32, #tpu.memory_space<vmem>>, %arg4: memref<3x64x256xbf16, #tpu.memory_space<vmem>>, %arg5: memref<1x256xf32, #tpu.memory_space<vmem>>, %arg6: memref<1x32x256xf32, #tpu.memory_space<vmem>>, %arg7: memref<48x256xf32, #tpu.memory_space<vmem>>) attributes {dimension_semantics = [#tpu.dimension_semantics<parallel>, #tpu.dimension_semantics<arbitrary>], iteration_bounds = array<i64: 2, 1>, scalar_prefetch = 0 : i64, scratch_operands = 1 : i64, tpu.core_type = #tpu.core_type<tc>, window_params = [{transform_indices = @transform_0, window_bounds = array<i64: 1, 16, 64>}, {pipeline_mode = #tpu.pipeline_mode<synchronous>, transform_indices = @transform_1, window_bounds = array<i64: 1, 32, 48>}, {pipeline_mode = #tpu.pipeline_mode<synchronous>, transform_indices = @transform_2, window_bounds = array<i64: 3, 64, 256>}, {pipeline_mode = #tpu.pipeline_mode<synchronous>, transform_indices = @transform_3, window_bounds = array<i64: 1, 256>}, {transform_indices = @transform_4, window_bounds = array<i64: 1, 32, 256>}]} {
    %c0_i32 = arith.constant 0 : i32
    %0 = arith.cmpi eq, %arg1, %c0_i32 : i32
    %1 = arith.extui %0 : i1 to i32
    %c0_i32_0 = arith.constant 0 : i32
    %2 = arith.cmpi ne, %1, %c0_i32_0 : i32
    scf.if %2 {
      %c0_9 = arith.constant 0 : index
      %c0_10 = arith.constant 0 : index
      %c0_11 = arith.constant 0 : index
      %14 = vector.load %arg2[%c0_9, %c0_10, %c0_11] : memref<1x16x64xbf16, #tpu.memory_space<vmem>>, vector<1x16x64xbf16>
      %15 = vector.shape_cast %14 : vector<1x16x64xbf16> to vector<16x64xbf16>
      %c0_12 = arith.constant 0 : index
      %c0_13 = arith.constant 0 : index
      %c0_14 = arith.constant 0 : index
      %16 = vector.load %arg4[%c0_12, %c0_13, %c0_14] : memref<3x64x256xbf16, #tpu.memory_space<vmem>>, vector<1x64x256xbf16>
      %17 = vector.shape_cast %16 : vector<1x64x256xbf16> to vector<64x256xbf16>
      %cst_15 = arith.constant dense<0.000000e+00> : vector<16x256xf32>
      %18 = tpu.matmul %15, %17, %cst_15 {dimension_numbers = #tpu.dot_dimension_numbers<[1], [0], [0], [1], [0, 0, 1, 1], [], []>} : vector<16x64xbf16>, vector<64x256xbf16>, vector<16x256xf32> -> vector<16x256xf32>
      %c0_16 = arith.constant 0 : index
      %c0_17 = arith.constant 0 : index
      %19 = vector.load %arg7[%c0_16, %c0_17] : memref<48x256xf32, #tpu.memory_space<vmem>>, vector<16x256xf32>
      tpu.vector_store %arg7[%c0_16, %c0_17], %18 {strides = array<i32>} : memref<48x256xf32, #tpu.memory_space<vmem>>, vector<16x256xf32>,
      %c1 = arith.constant 1 : index
      %c0_18 = arith.constant 0 : index
      %c0_19 = arith.constant 0 : index
      %20 = vector.load %arg4[%c1, %c0_18, %c0_19] : memref<3x64x256xbf16, #tpu.memory_space<vmem>>, vector<1x64x256xbf16>
      %21 = vector.shape_cast %20 : vector<1x64x256xbf16> to vector<64x256xbf16>
      %cst_20 = arith.constant dense<0.000000e+00> : vector<16x256xf32>
      %22 = tpu.matmul %15, %21, %cst_20 {dimension_numbers = #tpu.dot_dimension_numbers<[1], [0], [0], [1], [0, 0, 1, 1], [], []>} : vector<16x64xbf16>, vector<64x256xbf16>, vector<16x256xf32> -> vector<16x256xf32>
      %c16 = arith.constant 16 : index
      %c0_21 = arith.constant 0 : index
      %23 = vector.load %arg7[%c16, %c0_21] : memref<48x256xf32, #tpu.memory_space<vmem>>, vector<16x256xf32>
      tpu.vector_store %arg7[%c16, %c0_21], %22 {strides = array<i32>} : memref<48x256xf32, #tpu.memory_space<vmem>>, vector<16x256xf32>,
      %c2 = arith.constant 2 : index
      %c0_22 = arith.constant 0 : index
      %c0_23 = arith.constant 0 : index
      %24 = vector.load %arg4[%c2, %c0_22, %c0_23] : memref<3x64x256xbf16, #tpu.memory_space<vmem>>, vector<1x64x256xbf16>
      %25 = vector.shape_cast %24 : vector<1x64x256xbf16> to vector<64x256xbf16>
      %cst_24 = arith.constant dense<0.000000e+00> : vector<16x256xf32>
      %26 = tpu.matmul %15, %25, %cst_24 {dimension_numbers = #tpu.dot_dimension_numbers<[1], [0], [0], [1], [0, 0, 1, 1], [], []>} : vector<16x64xbf16>, vector<64x256xbf16>, vector<16x256xf32> -> vector<16x256xf32>
      %c32 = arith.constant 32 : index
      %c0_25 = arith.constant 0 : index
      %27 = vector.load %arg7[%c32, %c0_25] : memref<48x256xf32, #tpu.memory_space<vmem>>, vector<16x256xf32>
      tpu.vector_store %arg7[%c32, %c0_25], %26 {strides = array<i32>} : memref<48x256xf32, #tpu.memory_space<vmem>>, vector<16x256xf32>,
    } else {
    }
    %3 = arith.index_cast %arg1 : i32 to index
    %c0 = arith.constant 0 : index
    %c0_1 = arith.constant 0 : index
    %4 = vector.load %arg3[%3, %c0, %c0_1] : memref<1x32x48xf32, #tpu.memory_space<vmem>>, vector<1x32x48xf32>
    %5 = vector.shape_cast %4 : vector<1x32x48xf32> to vector<32x48xf32>
    %c0_2 = arith.constant 0 : index
    %c0_3 = arith.constant 0 : index
    %6 = vector.load %arg7[%c0_2, %c0_3] : memref<48x256xf32, #tpu.memory_space<vmem>>, vector<48x256xf32>
    %cst = arith.constant dense<0.000000e+00> : vector<32x256xf32>
    %7 = tpu.matmul %5, %6, %cst {dimension_numbers = #tpu.dot_dimension_numbers<[1], [0], [0], [1], [0, 0, 1, 1], [], []>} : vector<32x48xf32>, vector<48x256xf32>, vector<32x256xf32> -> vector<32x256xf32>
    %c0_4 = arith.constant 0 : index
    %c0_5 = arith.constant 0 : index
    %8 = vector.load %arg5[%c0_4, %c0_5] : memref<1x256xf32, #tpu.memory_space<vmem>>, vector<1x256xf32>
    %9 = vector.broadcast %8 : vector<1x256xf32> to vector<32x256xf32>
    %10 = arith.addf %7, %9 : vector<32x256xf32>
    %c0_6 = arith.constant 0 : index
    %c0_7 = arith.constant 0 : index
    %c0_8 = arith.constant 0 : index
    %11 = vector.load %arg6[%c0_6, %c0_7, %c0_8] : memref<1x32x256xf32, #tpu.memory_space<vmem>>, vector<1x32x256xf32>
    %12 = vector.shape_cast %11 : vector<1x32x256xf32> to vector<32x256xf32>
    %13 = vector.shape_cast %10 : vector<32x256xf32> to vector<1x32x256xf32>
    tpu.vector_store %arg6[%c0_6, %c0_7, %c0_8], %13 {strides = array<i32>} : memref<1x32x256xf32, #tpu.memory_space<vmem>>, vector<1x32x256xf32>,
    return
  }
  func.func @transform_0(%arg0: i32, %arg1: i32) -> (i32, i32, i32) {
    %c0_i32 = arith.constant 0 : i32
    %c0_i32_0 = arith.constant 0 : i32
    %c0_i32_1 = arith.constant 0 : i32
    return %arg0, %c0_i32, %c0_i32_0 : i32, i32, i32
  }
  func.func @transform_1(%arg0: i32, %arg1: i32) -> (i32, i32, i32) {
    %c0_i32 = arith.constant 0 : i32
    %c0_i32_0 = arith.constant 0 : i32
    %c0_i32_1 = arith.constant 0 : i32
    %c0_i32_2 = arith.constant 0 : i32
    return %c0_i32, %c0_i32_0, %c0_i32_1 : i32, i32, i32
  }
  func.func @transform_2(%arg0: i32, %arg1: i32) -> (i32, i32, i32) {
    %c0_i32 = arith.constant 0 : i32
    %c0_i32_0 = arith.constant 0 : i32
    %c0_i32_1 = arith.constant 0 : i32
    %c0_i32_2 = arith.constant 0 : i32
    return %c0_i32, %c0_i32_0, %c0_i32_1 : i32, i32, i32
  }
  func.func @transform_3(%arg0: i32, %arg1: i32) -> (i32, i32) {
    %c0_i32 = arith.constant 0 : i32
    %c0_i32_0 = arith.constant 0 : i32
    %c0_i32_1 = arith.constant 0 : i32
    return %c0_i32, %c0_i32_0 : i32, i32
  }
  func.func @transform_4(%arg0: i32, %arg1: i32) -> (i32, i32, i32) {
    %c0_i32 = arith.constant 0 : i32
    %c0_i32_0 = arith.constant 0 : i32
    return %arg0, %arg1, %c0_i32 : i32, i32, i32
  }
}

</mosaic_0001>

<llo_original>
// kernel: tpu_custom_call.1
$region0: #{tpu_custom_call.1}
  #allocation0 [shape = 'u32[]', space=smem, size = 0x4, offset = 0x4, fixed_abs, tag = 'smem constant byte address 0x4 - core index']
  #allocation1 [shape = 'u32[144,128]{1,0:T(1,128)}', space=vmem, size = 0x12000, scoped, tag = 'internal scratch']
  #allocation2 [shape = 'f32[48,256]{1,0:T(8,128)}', space=vmem, size = 0xc000, scoped, tag = 'scratch operand']
  %s0 = inlined_call_operand.hbm [shape: bf16[2,16,64], index: 0, kind: input, shape index: {}]
  %s1 = inlined_call_operand.hbm [shape: f32[1,32,48], index: 1, kind: input, shape index: {}]
  %s2 = inlined_call_operand.hbm [shape: bf16[3,64,256], index: 2, kind: input, shape index: {}]
  %s3 = inlined_call_operand.vmem [shape: f32[1,256], index: 3, kind: input, shape index: {}]
  %s4 = inlined_call_operand.hbm [shape: f32[2,32,256], index: 4, kind: output, shape index: {}]
  %s5 = sld [smem:[#allocation0]]
  $region65: #{tpu_custom_call.1} parent=0
    _
  %s7 = ssub.s32 1, %s5
  %s8 = scalar_select 0, %s7, %s5
  $region1: #{tpu_custom_call.1} parent=0
    #allocation3 [shape = 'u8[8192]{0}', space=vmem, size = 0x2000, scoped, tag = 'input window, operand 0']
    #allocation4 [shape = 's32[2]{0}', space=sflag, size = 0x8, scoped, tag = 'scoped memory for tpu_custom_call.1']
    #allocation5 [shape = 's32[2]{0}', space=sflag, size = 0x8, scoped, tag = 'scoped memory for tpu_custom_call.1']
    #allocation6 [shape = 'u8[16384]{0}', space=vmem, size = 0x4000, scoped, tag = 'input window, operand 1, single buffered']
    #allocation7 [shape = 's32[1]{0}', space=sflag, size = 0x4, scoped, tag = 'scoped memory for tpu_custom_call.1']
    #allocation8 [shape = 'u8[98304]{0}', space=vmem, size = 0x18000, scoped, tag = 'input window, operand 2, single buffered']
    #allocation9 [shape = 'u8[65536]{0}', space=vmem, size = 0x10000, scoped, tag = 'output window, operand 0']
    %9 = vsyncpa [#allocation4], 0
    %s10 = scalar_lea.sflag [#allocation4], 1
    %11 = vsyncpa %s10, 0
    %12 = vsyncpa [#allocation7], 0
    %13 = vsyncpa [#allocation5], 0
    %s14 = scalar_lea.sflag [#allocation5], 1
    %15 = vsyncpa %s14, 0
    loop: start=0, step=1, limit=4
    $region2: #{tpu_custom_call.1} parent=1 // loop_pre_header
      _
    $region3: #{tpu_custom_call.1} parent=1 // loop_header
      %s17 = sphi 0, %s21
      %p18 = scmp.ge.s32.totalorder %s17, 4
      %s24 = sphi 0, %s36
      %s25 = sphi 0, %s32
      %s26 = sphi 0, %s24
      %s27 = sphi 0, %s25
      %s28 = sphi 0, %s26
      %s29 = sphi 0, %s27
      %s39 = sphi 0, %s41
      %s42 = sphi 0, %s39
      %s43 = sphi 0, %s42
      %s59 = sphi 0, %s43
      %s63 = sphi 0, %s63
      %s65 = sphi 0, %s63
      %s66 = sphi 0, %s65
      %s80 = sphi 0, %s66
      %s84 = sphi 0, %s84
      %s86 = sphi 0, %s84
      %s87 = sphi 0, %s86
      %s101 = sphi 0, %s87
      %s105 = sphi 0, %s105
      %s107 = sphi 0, %s105
      %s108 = sphi 0, %s107
      %s122 = sphi 0, %s108
      %s130 = sphi 0, %s132
      %s133 = sphi 0, %s130
      %s134 = sphi 0, %s133
      %s150 = sphi 0, %s134
    $region4: #{tpu_custom_call.1} parent=1 // loop_header_branch
      %20 = sbr.rel (%p18) target = $region8
    $region5: #{tpu_custom_call.1} parent=1 // loop_body
      %s22 = ssub.s32 %s17, 1
      %s23 = ssub.s32 %s17, 2
      %s30 = sadd.s32 1, %s25
      %p31 = scmp.ge.s32.totalorder %s30, 1
      %s32 = scalar_select %p31, 0, %s30
      %s33 = sadd.s32 1, %s24
      %s34 = scalar_select %p31, %s33, %s24
      %p35 = scmp.ge.s32.totalorder %s34, 2
      %s36 = scalar_select %p35, 0, %s34
      %s37 = ssub.s32 %s24, %s36
      %p38 = scmp.eq.s32.totalorder %s37, 0
      %s40 = sadd.s32 %s39, 1
      %s41 = scalar_select %p38, %s39, %s40
      %p44 = pneg %p38
      %p45 = scmp.eq.s32.totalorder %s17, 1
      %p46 = por %p44, %p45
      %p47 = scmp.ne.s32.totalorder %s39, %s42
      %p48 = scmp.eq.s32.totalorder %s17, 0
      %p49 = por %p47, %p48
      %p50 = scmp.ne.s32.totalorder %s39, %s42
      %p51 = scmp.eq.s32.totalorder %s22, 1
      %p52 = por %p50, %p51
      %p53 = scmp.ne.s32.totalorder %s42, %s43
      %p54 = scmp.eq.s32.totalorder %s22, 0
      %p55 = por %p53, %p54
      %p56 = scmp.ne.s32.totalorder %s42, %s43
      %p57 = scmp.eq.s32.totalorder %s23, 1
      %p58 = por %p56, %p57
      %p60 = scmp.ne.s32.totalorder %s43, %s59
      %p61 = scmp.eq.s32.totalorder %s23, 0
      %p62 = por %p60, %p61
      %s64 = sadd.s32 %s63, 1
      %p67 = scmp.eq.s32.totalorder %s17, 1
      %p68 = scmp.ne.s32.totalorder %s63, %s65
      %p69 = scmp.eq.s32.totalorder %s17, 0
      %p70 = por %p68, %p69
      %p71 = scmp.ne.s32.totalorder %s63, %s65
      %p72 = scmp.eq.s32.totalorder %s22, 1
      %p73 = por %p71, %p72
      %p74 = scmp.ne.s32.totalorder %s65, %s66
      %p75 = scmp.eq.s32.totalorder %s22, 0
      %p76 = por %p74, %p75
      %p77 = scmp.ne.s32.totalorder %s65, %s66
      %p78 = scmp.eq.s32.totalorder %s23, 1
      %p79 = por %p77, %p78
      %p81 = scmp.ne.s32.totalorder %s66, %s80
      %p82 = scmp.eq.s32.totalorder %s23, 0
      %p83 = por %p81, %p82
      %s85 = sadd.s32 %s84, 1
      %p88 = scmp.eq.s32.totalorder %s17, 1
      %p89 = scmp.ne.s32.totalorder %s84, %s86
      %p90 = scmp.eq.s32.totalorder %s17, 0
      %p91 = por %p89, %p90
      %p92 = scmp.ne.s32.totalorder %s84, %s86
      %p93 = scmp.eq.s32.totalorder %s22, 1
      %p94 = por %p92, %p93
      %p95 = scmp.ne.s32.totalorder %s86, %s87
      %p96 = scmp.eq.s32.totalorder %s22, 0
      %p97 = por %p95, %p96
      %p98 = scmp.ne.s32.totalorder %s86, %s87
      %p99 = scmp.eq.s32.totalorder %s23, 1
      %p100 = por %p98, %p99
      %p102 = scmp.ne.s32.totalorder %s87, %s101
      %p103 = scmp.eq.s32.totalorder %s23, 0
      %p104 = por %p102, %p103
      %s106 = sadd.s32 %s105, 1
      %p109 = scmp.eq.s32.totalorder %s17, 1
      %p110 = scmp.ne.s32.totalorder %s105, %s107
      %p111 = scmp.eq.s32.totalorder %s17, 0
      %p112 = por %p110, %p111
      %p113 = scmp.ne.s32.totalorder %s105, %s107
      %p114 = scmp.eq.s32.totalorder %s22, 1
      %p115 = por %p113, %p114
      %p116 = scmp.ne.s32.totalorder %s107, %s108
      %p117 = scmp.eq.s32.totalorder %s22, 0
      %p118 = por %p116, %p117
      %p119 = scmp.ne.s32.totalorder %s107, %s108
      %p120 = scmp.eq.s32.totalorder %s23, 1
      %p121 = por %p119, %p120
      %p123 = scmp.ne.s32.totalorder %s108, %s122
      %p124 = scmp.eq.s32.totalorder %s23, 0
      %p125 = por %p123, %p124
      %s126 = ssub.s32 %s24, %s36
      %s127 = ssub.s32 %s25, %s32
      %s128 = sor.u32 %s126, %s127
      %p129 = scmp.eq.s32.totalorder %s128, 0
      %s131 = sadd.s32 %s130, 1
      %s132 = scalar_select %p129, %s130, %s131
      %p135 = pneg %p129
      %p136 = scmp.eq.s32.totalorder %s17, 1
      %p137 = por %p135, %p136
      %p138 = scmp.ne.s32.totalorder %s130, %s133
      %p139 = scmp.eq.s32.totalorder %s17, 0
      %p140 = por %p138, %p139
      %p141 = scmp.ne.s32.totalorder %s130, %s133
      %p142 = scmp.eq.s32.totalorder %s22, 1
      %p143 = por %p141, %p142
      %p144 = scmp.ne.s32.totalorder %s133, %s134
      %p145 = scmp.eq.s32.totalorder %s22, 0
      %p146 = por %p144, %p145
      %p147 = scmp.ne.s32.totalorder %s133, %s134
      %p148 = scmp.eq.s32.totalorder %s23, 1
      %p149 = por %p147, %p148
      %p151 = scmp.ne.s32.totalorder %s134, %s150
      %p152 = scmp.eq.s32.totalorder %s23, 0
      %p153 = por %p151, %p152
      %p154 = scmp.le.s32.totalorder 1, %s17
      %p155 = scmp.lt.s32.totalorder %s17, 3
      %p156 = pnand %p154, %p155
      %p157 = pneg %p156
      // Predicated region
      $region9: #{tpu_custom_call.1} parent=5 // pred_check
        _
      $region10: #{tpu_custom_call.1} parent=5 // pred_check_branch
        %159 = sbr.rel (%p156) target = $region12
      $region11: #{tpu_custom_call.1} parent=5 // pred_region
        %s160 = ssub.s32 %s17, 1
        // Predicated region
        $region13: #{tpu_custom_call.1} parent=11 // pred_check
          %p161 = pneg %p76
        $region14: #{tpu_custom_call.1} parent=11 // pred_check_branch
          %163 = sbr.rel (%p161) target = $region16
        $region15: #{tpu_custom_call.1} parent=11 // pred_region
          %s165 = ssub.s32 512, 512
          %166 = vsyncadd [#allocation7], %s165
          %s167 = sshll.u32 [#allocation6], 4
          %s168 = int_to_ptr.vmem [resolvable:$true] %s167
          %173 = dma.hbm_to_vmem [thread:$0]  %s1, 512, %s168, [#allocation7], 128, 128, 8
        $region16: #{tpu_custom_call.1} parent=11 // pred_fallthru
          _
        // Predicated region
        $region17: #{tpu_custom_call.1} parent=11 // pred_check
          %p174 = pneg %p97
        $region18: #{tpu_custom_call.1} parent=11 // pred_check_branch
          %176 = sbr.rel (%p174) target = $region20
        $region19: #{tpu_custom_call.1} parent=11 // pred_region
          %s178 = ssub.s32 3072, 3072
          %179 = vsyncadd [#allocation7], %s178
          %s180 = sshll.u32 [#allocation8], 4
          %s181 = int_to_ptr.vmem [resolvable:$true] %s180
          %186 = dma.hbm_to_vmem [thread:$0]  %s2, 3072, %s181, [#allocation7], 128, 128, 8
        $region20: #{tpu_custom_call.1} parent=11 // pred_fallthru
          _
        // Predicated region
        $region21: #{tpu_custom_call.1} parent=11 // pred_check
          %p187 = pneg %p118
        $region22: #{tpu_custom_call.1} parent=11 // pred_check_branch
          %189 = sbr.rel (%p187) target = $region24
        $region23: #{tpu_custom_call.1} parent=11 // pred_region
          _
        $region24: #{tpu_custom_call.1} parent=11 // pred_fallthru
          _
      $region12: #{tpu_custom_call.1} parent=5 // pred_fallthru
        _
      %p190 = scmp.lt.s32.totalorder %s17, 2
      // Predicated region
      $region25: #{tpu_custom_call.1} parent=5 // pred_check
        %p191 = pneg %p190
      $region26: #{tpu_custom_call.1} parent=5 // pred_check_branch
        %193 = sbr.rel (%p191) target = $region28
      $region27: #{tpu_custom_call.1} parent=5 // pred_region
        // Predicated region
        $region29: #{tpu_custom_call.1} parent=27 // pred_check
          %p194 = pneg %p49
        $region30: #{tpu_custom_call.1} parent=27 // pred_check_branch
          %196 = sbr.rel (%p194) target = $region32
        $region31: #{tpu_custom_call.1} parent=27 // pred_region
          %s197 = sand.u32 %s39, 1
          %s198 = scalar_lea.sflag [#allocation4], %s197
          %s199 = sand.u32 %s39, 1
          %s200 = smul.addr %s199, 8
          %s201 = scalar_lea.vmem [#allocation3], %s200
          %s203 = ssub.s32 128, 128
          %204 = vsyncadd %s198, %s203
          %s205 = smul.addr %s24, 2
          %s206 = smul.addr %s205, 64
          %s207 = scalar_lea.hbm %s0, %s206
          %s208 = sshll.u32 %s201, 4
          %s209 = int_to_ptr.vmem [resolvable:$true] %s208
          %214 = dma.hbm_to_vmem [thread:$0]  %s207, 128, %s209, %s198, 64, 64, 4
        $region32: #{tpu_custom_call.1} parent=27 // pred_fallthru
          _
      $region28: #{tpu_custom_call.1} parent=5 // pred_fallthru
        _
      %p215 = scmp.le.s32.totalorder 1, %s17
      %p216 = scmp.lt.s32.totalorder %s17, 3
      %p217 = pnand %p215, %p216
      %p218 = pneg %p217
      // Predicated region
      $region33: #{tpu_custom_call.1} parent=5 // pred_check
        _
      $region34: #{tpu_custom_call.1} parent=5 // pred_check_branch
        %220 = sbr.rel (%p217) target = $region36
      $region35: #{tpu_custom_call.1} parent=5 // pred_region
        %s221 = ssub.s32 %s17, 1
        %s222 = sand.u32 %s42, 1
        %s223 = scalar_lea.sflag [#allocation4], %s222
        %s224 = sand.u32 %s42, 1
        %s225 = smul.addr %s224, 8
        %s226 = scalar_lea.vmem [#allocation3], %s225
        // Predicated region
        $region37: #{tpu_custom_call.1} parent=35 // pred_check
          %p227 = pneg %p55
        $region38: #{tpu_custom_call.1} parent=35 // pred_check_branch
          %229 = sbr.rel (%p227) target = $region40
        $region39: #{tpu_custom_call.1} parent=35 // pred_region
          %230 = dma.done %s223, 128
        $region40: #{tpu_custom_call.1} parent=35 // pred_fallthru
          _
        // Predicated region
        $region41: #{tpu_custom_call.1} parent=35 // pred_check
          %p231 = pneg %p76
        $region42: #{tpu_custom_call.1} parent=35 // pred_check_branch
          %233 = sbr.rel (%p231) target = $region44
        $region43: #{tpu_custom_call.1} parent=35 // pred_region
          %234 = dma.done [#allocation7], 512
        $region44: #{tpu_custom_call.1} parent=35 // pred_fallthru
          _
        // Predicated region
        $region45: #{tpu_custom_call.1} parent=35 // pred_check
          %p235 = pneg %p97
        $region46: #{tpu_custom_call.1} parent=35 // pred_check_branch
          %237 = sbr.rel (%p235) target = $region48
        $region47: #{tpu_custom_call.1} parent=35 // pred_region
          %238 = dma.done [#allocation7], 3072
        $region48: #{tpu_custom_call.1} parent=35 // pred_fallthru
          _
        %s239 = sand.u32 %s42, 1
        %s240 = scalar_lea.sflag [#allocation4], %s239
        %s241 = sand.u32 %s42, 1
        %s242 = smul.addr %s241, 8
        %s243 = scalar_lea.vmem [#allocation3], %s242
        %p244 = pneg %p55
        %p245 = pneg %p52
        %p246 = pneg %p76
        %p247 = pneg %p73
        %p248 = pneg %p97
        %p249 = pneg %p94
        %p250 = pneg %p118
        %p251 = pneg %p115
        %p252 = pneg %p146
        %p253 = pneg %p143
        %s254 = sand.u32 %s133, 1
        %s255 = scalar_lea.sflag [#allocation5], %s254
        %s256 = sand.u32 %s133, 1
        %s257 = smul.addr %s256, 64
        %s258 = scalar_lea.vmem [#allocation9], %s257
        %s259 = smul.u32 4, %s27
        %p261 = scmp.eq.s32.totalorder %s27, 0
        // Predicated region
        $region49: #{tpu_custom_call.1} parent=35 // pred_check
          %p262 = pneg %p261
        $region50: #{tpu_custom_call.1} parent=35 // pred_check_branch
          %264 = sbr.rel (%p262) target = $region52
        $region51: #{tpu_custom_call.1} parent=35 // pred_region
          %v265 = vld [vmem:[%s226] sm:$0xf]
          %v266 = vld [vmem:[%s226 + $0x4] sm:$0xf]
          %v267 = vld [vmem:[#allocation8] sm:$0xff]
          %v268 = vld [vmem:[#allocation8 + $0x8] sm:$0xff]
          %v269 = vld [vmem:[#allocation8 + $0x10] sm:$0xff]
          %v270 = vld [vmem:[#allocation8 + $0x18] sm:$0xff]
          %v271 = vld [vmem:[#allocation8 + $0x20] sm:$0xff]
          %v272 = vld [vmem:[#allocation8 + $0x28] sm:$0xff]
          %v273 = vld [vmem:[#allocation8 + $0x30] sm:$0xff]
          %v274 = vld [vmem:[#allocation8 + $0x38] sm:$0xff]
          %v277 = vunpack.c.l.b16 %v265
          %v278 = vunpack.c.l.b16 %v266
          %v279 = vpack.c.b16 %v278, %v277
          %v288 = vunpack.c.l.b16 %v267
          %v289 = vunpack.c.h.b16 %v267
          %v290 = vunpack.c.l.b16 %v268
          %v291 = vunpack.c.h.b16 %v268
          %v292 = vunpack.c.l.b16 %v269
          %v293 = vunpack.c.h.b16 %v269
          %v294 = vunpack.c.l.b16 %v270
          %v295 = vunpack.c.h.b16 %v270
          %v296 = vunpack.c.l.b16 %v271
          %v297 = vunpack.c.h.b16 %v271
          %v298 = vunpack.c.l.b16 %v272
          %v299 = vunpack.c.h.b16 %v272
          %v300 = vunpack.c.l.b16 %v273
          %v301 = vunpack.c.h.b16 %v273
          %v302 = vunpack.c.l.b16 %v274
          %v303 = vunpack.c.h.b16 %v274
          %v304 = vpack.c.b16 %v290, %v288
          %v305 = vpack.c.b16 %v291, %v289
          %v306 = vpack.c.b16 %v294, %v292
          %v307 = vpack.c.b16 %v295, %v293
          %v308 = vpack.c.b16 %v298, %v296
          %v309 = vpack.c.b16 %v299, %v297
          %v310 = vpack.c.b16 %v302, %v300
          %v311 = vpack.c.b16 %v303, %v301
          %vm320 = vcmask 523264
          %v322 = vsel %vm320, %v279, 0
          %324 = vmatprep.subr.bf16.mxu0 %v305
          %325 = vmatpush1.bf16.msra.mxu0 %v304
          %326 = vmatprep.subr.bf16.mxu0 %v307
          %327 = vmatpush1.bf16.msra.mxu0 %v306
          %328 = vmatprep.subr.bf16.mxu0 %v309
          %329 = vmatpush1.bf16.msra.mxu0 %v308
          %330 = vmatprep.subr.bf16.mxu0 %v311
          %331 = vmatpush1.bf16.msra.mxu0 %v310
          %332 = vmatprep.subr.bf16.mxu0 0
          %333 = vmatpush1.bf16.msra.mxu0 0
          %334 = vmatprep.subr.bf16.mxu0 0
          %335 = vmatpush1.bf16.msra.mxu0 0
          %336 = vmatprep.subr.bf16.mxu0 0
          %337 = vmatpush1.bf16.msra.mxu0 0
          %338 = vmatprep.subr.bf16.mxu0 0
          %339 = vmatpush1.bf16.msra.mxu0 0
          %340 = vmatprep.subr.bf16.mxu0 0
          %341 = vmatpush1.bf16.msra.mxu0 0
          %342 = vmatprep.subr.bf16.mxu0 0
          %343 = vmatpush1.bf16.msra.mxu0 0
          %344 = vmatprep.subr.bf16.mxu0 0
          %345 = vmatpush1.bf16.msra.mxu0 0
          %346 = vmatprep.subr.bf16.mxu0 0
          %347 = vmatpush1.bf16.msra.mxu0 0
          %348 = vmatprep.subr.bf16.mxu0 0
          %349 = vmatpush1.bf16.msra.mxu0 0
          %350 = vmatprep.subr.bf16.mxu0 0
          %351 = vmatpush1.bf16.msra.mxu0 0
          %352 = vmatprep.subr.bf16.mxu0 0
          %353 = vmatpush1.bf16.msra.mxu0 0
          %354 = vmatprep.subr.bf16.mxu0 0
          %355 = vmatpush1.bf16.msra.mxu0 0
          %356 = vmatprep.mubr.bf16.mxu0 0
          %357 = vmatmul.mubr.bf16.gmra.mrb[0].mxu0 %v322
          %v358 = vpop.f32.mrb[0].mxu0
          %v359 = vadd.f32 0.0, %v358
          %v360 = vpop.f32.mrb[0].mxu0
          %v361 = vadd.f32 0.0, %v360
          %v362 = vpop.f32.mrb[0].mxu0
          %v363 = vadd.f32 0.0, %v362
          %v364 = vpop.f32.mrb[0].mxu0
          %v365 = vadd.f32 0.0, %v364
          %366 = vdwg.mxu0
          %367 = vst [vmem:[#allocation2] sm:$0xff] %v359
          %368 = vst [vmem:[#allocation2 + $0x8] sm:$0xff] %v361
          %369 = vst [vmem:[#allocation2 + $0x10] sm:$0xff] %v363
          %370 = vst [vmem:[#allocation2 + $0x18] sm:$0xff] %v365
          %s371 = scalar_lea.vmem [#allocation8], 64
          %v372 = vld [vmem:[%s371] sm:$0xff]
          %v373 = vld [vmem:[%s371 + $0x8] sm:$0xff]
          %v374 = vld [vmem:[%s371 + $0x10] sm:$0xff]
          %v375 = vld [vmem:[%s371 + $0x18] sm:$0xff]
          %v376 = vld [vmem:[%s371 + $0x20] sm:$0xff]
          %v377 = vld [vmem:[%s371 + $0x28] sm:$0xff]
          %v378 = vld [vmem:[%s371 + $0x30] sm:$0xff]
          %v379 = vld [vmem:[%s371 + $0x38] sm:$0xff]
          %v388 = vunpack.c.l.b16 %v372
          %v389 = vunpack.c.h.b16 %v372
          %v390 = vunpack.c.l.b16 %v373
          %v391 = vunpack.c.h.b16 %v373
          %v392 = vunpack.c.l.b16 %v374
          %v393 = vunpack.c.h.b16 %v374
          %v394 = vunpack.c.l.b16 %v375
          %v395 = vunpack.c.h.b16 %v375
          %v396 = vunpack.c.l.b16 %v376
          %v397 = vunpack.c.h.b16 %v376
          %v398 = vunpack.c.l.b16 %v377
          %v399 = vunpack.c.h.b16 %v377
          %v400 = vunpack.c.l.b16 %v378
          %v401 = vunpack.c.h.b16 %v378
          %v402 = vunpack.c.l.b16 %v379
          %v403 = vunpack.c.h.b16 %v379
          %v404 = vpack.c.b16 %v390, %v388
          %v405 = vpack.c.b16 %v391, %v389
          %v406 = vpack.c.b16 %v394, %v392
          %v407 = vpack.c.b16 %v395, %v393
          %v408 = vpack.c.b16 %v398, %v396
          %v409 = vpack.c.b16 %v399, %v397
          %v410 = vpack.c.b16 %v402, %v400
          %v411 = vpack.c.b16 %v403, %v401
          %420 = vmatprep.subr.bf16.mxu0 %v405
          %421 = vmatpush1.bf16.msra.mxu0 %v404
          %422 = vmatprep.subr.bf16.mxu0 %v407
          %423 = vmatpush1.bf16.msra.mxu0 %v406
          %424 = vmatprep.subr.bf16.mxu0 %v409
          %425 = vmatpush1.bf16.msra.mxu0 %v408
          %426 = vmatprep.subr.bf16.mxu0 %v411
          %427 = vmatpush1.bf16.msra.mxu0 %v410
          %428 = vmatprep.subr.bf16.mxu0 0
          %429 = vmatpush1.bf16.msra.mxu0 0
          %430 = vmatprep.subr.bf16.mxu0 0
          %431 = vmatpush1.bf16.msra.mxu0 0
          %432 = vmatprep.subr.bf16.mxu0 0
          %433 = vmatpush1.bf16.msra.mxu0 0
          %434 = vmatprep.subr.bf16.mxu0 0
          %435 = vmatpush1.bf16.msra.mxu0 0
          %436 = vmatprep.subr.bf16.mxu0 0
          %437 = vmatpush1.bf16.msra.mxu0 0
          %438 = vmatprep.subr.bf16.mxu0 0
          %439 = vmatpush1.bf16.msra.mxu0 0
          %440 = vmatprep.subr.bf16.mxu0 0
          %441 = vmatpush1.bf16.msra.mxu0 0
          %442 = vmatprep.subr.bf16.mxu0 0
          %443 = vmatpush1.bf16.msra.mxu0 0
          %444 = vmatprep.subr.bf16.mxu0 0
          %445 = vmatpush1.bf16.msra.mxu0 0
          %446 = vmatprep.subr.bf16.mxu0 0
          %447 = vmatpush1.bf16.msra.mxu0 0
          %448 = vmatprep.subr.bf16.mxu0 0
          %449 = vmatpush1.bf16.msra.mxu0 0
          %450 = vmatprep.subr.bf16.mxu0 0
          %451 = vmatpush1.bf16.msra.mxu0 0
          %452 = vmatprep.mubr.bf16.mxu0 0
          %453 = vmatmul.mubr.bf16.gmra.mrb[0].mxu0 %v322
          %v454 = vpop.f32.mrb[0].mxu0
          %v455 = vadd.f32 0.0, %v454
          %v456 = vpop.f32.mrb[0].mxu0
          %v457 = vadd.f32 0.0, %v456
          %v458 = vpop.f32.mrb[0].mxu0
          %v459 = vadd.f32 0.0, %v458
          %v460 = vpop.f32.mrb[0].mxu0
          %v461 = vadd.f32 0.0, %v460
          %462 = vdwg.mxu0
          %463 = vst [vmem:[#allocation2 + $0x20] sm:$0xff] %v455
          %464 = vst [vmem:[#allocation2 + $0x28] sm:$0xff] %v457
          %465 = vst [vmem:[#allocation2 + $0x30] sm:$0xff] %v459
          %466 = vst [vmem:[#allocation2 + $0x38] sm:$0xff] %v461
          %s467 = scalar_lea.vmem [#allocation8], 128
          %v468 = vld [vmem:[%s467] sm:$0xff]
          %v469 = vld [vmem:[%s467 + $0x8] sm:$0xff]
          %v470 = vld [vmem:[%s467 + $0x10] sm:$0xff]
          %v471 = vld [vmem:[%s467 + $0x18] sm:$0xff]
          %v472 = vld [vmem:[%s467 + $0x20] sm:$0xff]
          %v473 = vld [vmem:[%s467 + $0x28] sm:$0xff]
          %v474 = vld [vmem:[%s467 + $0x30] sm:$0xff]
          %v475 = vld [vmem:[%s467 + $0x38] sm:$0xff]
          %v484 = vunpack.c.l.b16 %v468
          %v485 = vunpack.c.h.b16 %v468
          %v486 = vunpack.c.l.b16 %v469
          %v487 = vunpack.c.h.b16 %v469
          %v488 = vunpack.c.l.b16 %v470
          %v489 = vunpack.c.h.b16 %v470
          %v490 = vunpack.c.l.b16 %v471
          %v491 = vunpack.c.h.b16 %v471
          %v492 = vunpack.c.l.b16 %v472
          %v493 = vunpack.c.h.b16 %v472
          %v494 = vunpack.c.l.b16 %v473
          %v495 = vunpack.c.h.b16 %v473
          %v496 = vunpack.c.l.b16 %v474
          %v497 = vunpack.c.h.b16 %v474
          %v498 = vunpack.c.l.b16 %v475
          %v499 = vunpack.c.h.b16 %v475
          %v500 = vpack.c.b16 %v486, %v484
          %v501 = vpack.c.b16 %v487, %v485
          %v502 = vpack.c.b16 %v490, %v488
          %v503 = vpack.c.b16 %v491, %v489
          %v504 = vpack.c.b16 %v494, %v492
          %v505 = vpack.c.b16 %v495, %v493
          %v506 = vpack.c.b16 %v498, %v496
          %v507 = vpack.c.b16 %v499, %v497
          %516 = vmatprep.subr.bf16.mxu0 %v501
          %517 = vmatpush1.bf16.msra.mxu0 %v500
          %518 = vmatprep.subr.bf16.mxu0 %v503
          %519 = vmatpush1.bf16.msra.mxu0 %v502
          %520 = vmatprep.subr.bf16.mxu0 %v505
          %521 = vmatpush1.bf16.msra.mxu0 %v504
          %522 = vmatprep.subr.bf16.mxu0 %v507
          %523 = vmatpush1.bf16.msra.mxu0 %v506
          %524 = vmatprep.subr.bf16.mxu0 0
          %525 = vmatpush1.bf16.msra.mxu0 0
          %526 = vmatprep.subr.bf16.mxu0 0
          %527 = vmatpush1.bf16.msra.mxu0 0
          %528 = vmatprep.subr.bf16.mxu0 0
          %529 = vmatpush1.bf16.msra.mxu0 0
          %530 = vmatprep.subr.bf16.mxu0 0
          %531 = vmatpush1.bf16.msra.mxu0 0
          %532 = vmatprep.subr.bf16.mxu0 0
          %533 = vmatpush1.bf16.msra.mxu0 0
          %534 = vmatprep.subr.bf16.mxu0 0
          %535 = vmatpush1.bf16.msra.mxu0 0
          %536 = vmatprep.subr.bf16.mxu0 0
          %537 = vmatpush1.bf16.msra.mxu0 0
          %538 = vmatprep.subr.bf16.mxu0 0
          %539 = vmatpush1.bf16.msra.mxu0 0
          %540 = vmatprep.subr.bf16.mxu0 0
          %541 = vmatpush1.bf16.msra.mxu0 0
          %542 = vmatprep.subr.bf16.mxu0 0
          %543 = vmatpush1.bf16.msra.mxu0 0
          %544 = vmatprep.subr.bf16.mxu0 0
          %545 = vmatpush1.bf16.msra.mxu0 0
          %546 = vmatprep.subr.bf16.mxu0 0
          %547 = vmatpush1.bf16.msra.mxu0 0
          %548 = vmatprep.mubr.bf16.mxu0 0
          %549 = vmatmul.mubr.bf16.gmra.mrb[0].mxu0 %v322
          %v550 = vpop.f32.mrb[0].mxu0
          %v551 = vadd.f32 0.0, %v550
          %v552 = vpop.f32.mrb[0].mxu0
          %v553 = vadd.f32 0.0, %v552
          %v554 = vpop.f32.mrb[0].mxu0
          %v555 = vadd.f32 0.0, %v554
          %v556 = vpop.f32.mrb[0].mxu0
          %v557 = vadd.f32 0.0, %v556
          %558 = vdwg.mxu0
          %559 = vst [vmem:[#allocation2 + $0x40] sm:$0xff] %v551
          %560 = vst [vmem:[#allocation2 + $0x48] sm:$0xff] %v553
          %561 = vst [vmem:[#allocation2 + $0x50] sm:$0xff] %v555
          %562 = vst [vmem:[#allocation2 + $0x58] sm:$0xff] %v557
        $region52: #{tpu_custom_call.1} parent=35 // pred_fallthru
          _
        %s563 = smul.u32 %s27, 32
        %s564 = scalar_lea.vmem [#allocation6], %s563
        %v565 = vld [vmem:[%s564] sm:$0xff]
        %v566 = vld [vmem:[%s564 + $0x8] sm:$0xff]
        %v567 = vld [vmem:[%s564 + $0x10] sm:$0xff]
        %v568 = vld [vmem:[%s564 + $0x18] sm:$0xff]
        %v569 = vld [vmem:[#allocation2] sm:$0xff]
        %v570 = vld [vmem:[#allocation2 + $0x8] sm:$0xff]
        %v571 = vld [vmem:[#allocation2 + $0x10] sm:$0xff]
        %v572 = vld [vmem:[#allocation2 + $0x18] sm:$0xff]
        %v573 = vld [vmem:[#allocation2 + $0x20] sm:$0xff]
        %v574 = vld [vmem:[#allocation2 + $0x28] sm:$0xff]
        %v575 = vld [vmem:[#allocation2 + $0x30] sm:$0xff]
        %v576 = vld [vmem:[#allocation2 + $0x38] sm:$0xff]
        %v577 = vld [vmem:[#allocation2 + $0x40] sm:$0xff]
        %v578 = vld [vmem:[#allocation2 + $0x48] sm:$0xff]
        %v579 = vld [vmem:[#allocation2 + $0x50] sm:$0xff]
        %v580 = vld [vmem:[#allocation2 + $0x58] sm:$0xff]
        %v581 = vld [vmem:[%s3] sm:$0x3]
        %v583 = vlaneseq
        %v584 = vshrl.u32 %v583, 7
        %v585 = vsub.s32 0, %v584
        %v586 = vrot.slane %v581, %v585
        %v587 = vlaneseq
        %v588 = vshrl.u32 %v587, 7
        %v589 = vsub.s32 1, %v588
        %v590 = vrot.slane %v581, %v589
        %vm593 = vcmask 392192
        %v595 = vsel %vm593, %v565, 0
        %v598 = vsel %vm593, %v566, 0
        %v601 = vsel %vm593, %v567, 0
        %v604 = vsel %vm593, %v568, 0
        %606 = vmatprep.subr.mxu0 %v570
        %607 = vmatpush1.msra.mxu0 %v569
        %608 = vmatprep.subr.mxu0 %v572
        %609 = vmatpush1.msra.mxu0 %v571
        %610 = vmatprep.subr.mxu0 %v574
        %611 = vmatpush1.msra.mxu0 %v573
        %612 = vmatprep.subr.mxu0 %v576
        %613 = vmatpush1.msra.mxu0 %v575
        %614 = vmatprep.subr.mxu0 %v578
        %615 = vmatpush1.msra.mxu0 %v577
        %616 = vmatprep.subr.mxu0 %v580
        %617 = vmatpush1.msra.mxu0 %v579
        %618 = vmatprep.subr.mxu0 0.0
        %619 = vmatpush1.msra.mxu0 0.0
        %620 = vmatprep.subr.mxu0 0.0
        %621 = vmatpush1.msra.mxu0 0.0
        %622 = vmatprep.subr.mxu0 0.0
        %623 = vmatpush1.msra.mxu0 0.0
        %624 = vmatprep.subr.mxu0 0.0
        %625 = vmatpush1.msra.mxu0 0.0
        %626 = vmatprep.subr.mxu0 0.0
        %627 = vmatpush1.msra.mxu0 0.0
        %628 = vmatprep.subr.mxu0 0.0
        %629 = vmatpush1.msra.mxu0 0.0
        %630 = vmatprep.subr.mxu0 0.0
        %631 = vmatpush1.msra.mxu0 0.0
        %632 = vmatprep.subr.mxu0 0.0
        %633 = vmatpush1.msra.mxu0 0.0
        %634 = vmatprep.subr.mxu0 0.0
        %635 = vmatpush1.msra.mxu0 0.0
        %636 = vmatprep.subr.mxu0 0.0
        %637 = vmatpush1.msra.mxu0 0.0
        %638 = vmatprep.subr.mxu0 0.0
        %639 = vmatpush1.msra.mxu0 0.0
        %640 = vmatprep.subr.mxu0 0.0
        %641 = vmatpush1.msra.mxu0 0.0
        %642 = vmatprep.subr.mxu0 0.0
        %643 = vmatpush1.msra.mxu0 0.0
        %644 = vmatprep.subr.mxu0 0.0
        %645 = vmatpush1.msra.mxu0 0.0
        %646 = vmatprep.subr.mxu0 0.0
        %647 = vmatpush1.msra.mxu0 0.0
        %648 = vmatprep.subr.mxu0 0.0
        %649 = vmatpush1.msra.mxu0 0.0
        %650 = vmatprep.subr.mxu0 0.0
        %651 = vmatpush1.msra.mxu0 0.0
        %652 = vmatprep.subr.mxu0 0.0
        %653 = vmatpush1.msra.mxu0 0.0
        %654 = vmatprep.subr.mxu0 0.0
        %655 = vmatpush1.msra.mxu0 0.0
        %656 = vmatprep.subr.mxu0 0.0
        %657 = vmatpush1.msra.mxu0 0.0
        %658 = vmatprep.subr.mxu0 0.0
        %659 = vmatpush1.msra.mxu0 0.0
        %660 = vmatprep.subr.mxu0 0.0
        %661 = vmatpush1.msra.mxu0 0.0
        %662 = vmatprep.subr.mxu0 0.0
        %663 = vmatpush1.msra.mxu0 0.0
        %664 = vmatprep.subr.mxu0 0.0
        %665 = vmatpush1.msra.mxu0 0.0
        %666 = vmatprep.subr.mxu0 0.0
        %667 = vmatpush1.msra.mxu0 0.0
        %668 = vmatprep.subr.mxu0 0.0
        %669 = vmatpush1.msra.mxu0 0.0
        %670 = vmatprep.mubr.f32.mxu0 0.0
        %671 = vmatmul.mubr.f32.gmra.mrb[0].mxu0 %v595
        %v672 = vpop.f32.mrb[0].mxu0
        %v673 = vadd.f32 %v586, %v672
        %v674 = vpop.f32.mrb[0].mxu0
        %v675 = vadd.f32 %v590, %v674
        %676 = vmatprep.mubr.f32.mxu0 0.0
        %677 = vmatmul.mubr.f32.gmra.mrb[0].mxu0 %v598
        %v678 = vpop.f32.mrb[0].mxu0
        %v679 = vadd.f32 %v586, %v678
        %v680 = vpop.f32.mrb[0].mxu0
        %v681 = vadd.f32 %v590, %v680
        %682 = vmatprep.mubr.f32.mxu0 0.0
        %683 = vmatmul.mubr.f32.gmra.mrb[0].mxu0 %v601
        %v684 = vpop.f32.mrb[0].mxu0
        %v685 = vadd.f32 %v586, %v684
        %v686 = vpop.f32.mrb[0].mxu0
        %v687 = vadd.f32 %v590, %v686
        %688 = vmatprep.mubr.f32.mxu0 0.0
        %689 = vmatmul.mubr.f32.gmra.mrb[0].mxu0 %v604
        %v690 = vpop.f32.mrb[0].mxu0
        %v691 = vadd.f32 %v586, %v690
        %v692 = vpop.f32.mrb[0].mxu0
        %v693 = vadd.f32 %v590, %v692
        %694 = vdwg.mxu0
        %695 = vst [vmem:[%s258] sm:$0xff] %v673
        %696 = vst [vmem:[%s258 + $0x8] sm:$0xff] %v675
        %697 = vst [vmem:[%s258 + $0x10] sm:$0xff] %v679
        %698 = vst [vmem:[%s258 + $0x18] sm:$0xff] %v681
        %699 = vst [vmem:[%s258 + $0x20] sm:$0xff] %v685
        %700 = vst [vmem:[%s258 + $0x28] sm:$0xff] %v687
        %701 = vst [vmem:[%s258 + $0x30] sm:$0xff] %v691
        %702 = vst [vmem:[%s258 + $0x38] sm:$0xff] %v693
        %s703 = sand.u32 %s133, 1
        %s704 = scalar_lea.sflag [#allocation5], %s703
        %s705 = sand.u32 %s133, 1
        %s706 = smul.addr %s705, 64
        %s707 = scalar_lea.vmem [#allocation9], %s706
        // Predicated region
        $region53: #{tpu_custom_call.1} parent=35 // pred_check
          %p708 = pneg %p143
        $region54: #{tpu_custom_call.1} parent=35 // pred_check_branch
          %710 = sbr.rel (%p708) target = $region56
        $region55: #{tpu_custom_call.1} parent=35 // pred_region
          %s711 = smul.u32 4, %s27
          %s713 = ssub.s32 1024, 1024
          %714 = vsyncadd %s704, %s713
          %s715 = smul.addr %s711, 2
          %s716 = smul.addr %s26, 8
          %s717 = sadd.s32 %s715, %s716
          %s718 = smul.addr %s717, 128
          %s719 = scalar_lea.hbm %s4, %s718
          %s720 = sshll.u32 %s707, 4
          %s721 = int_to_ptr.vmem [resolvable:$true] %s720
          %726 = dma.vmem_to_hbm [thread:$0]  %s721, 1024, %s719, %s704, 256, 256, 16
        $region56: #{tpu_custom_call.1} parent=35 // pred_fallthru
          _
      $region36: #{tpu_custom_call.1} parent=5 // pred_fallthru
        _
      %p727 = scmp.le.s32.totalorder 2, %s17
      // Predicated region
      $region57: #{tpu_custom_call.1} parent=5 // pred_check
        %p728 = pneg %p727
      $region58: #{tpu_custom_call.1} parent=5 // pred_check_branch
        %730 = sbr.rel (%p728) target = $region60
      $region59: #{tpu_custom_call.1} parent=5 // pred_region
        %s731 = ssub.s32 %s17, 2
        // Predicated region
        $region61: #{tpu_custom_call.1} parent=59 // pred_check
          %p732 = pneg %p149
        $region62: #{tpu_custom_call.1} parent=59 // pred_check_branch
          %734 = sbr.rel (%p732) target = $region64
        $region63: #{tpu_custom_call.1} parent=59 // pred_region
          %s735 = sand.u32 %s134, 1
          %s736 = scalar_lea.sflag [#allocation5], %s735
          %s737 = sand.u32 %s134, 1
          %s738 = smul.addr %s737, 64
          %s739 = scalar_lea.vmem [#allocation9], %s738
          %740 = dma.done %s736, 1024
        $region64: #{tpu_custom_call.1} parent=59 // pred_fallthru
          _
      $region60: #{tpu_custom_call.1} parent=5 // pred_fallthru
        _
    $region6: #{tpu_custom_call.1} parent=1 // loop_footer
      %s21 = sadd.s32 1, %s17
    $region7: #{tpu_custom_call.1} parent=1 // loop_footer_branch
      %16 = sbr.rel target = $region3
    $region8: #{tpu_custom_call.1} parent=1 // loop_exit
      _
    %741 = vsyncpa [#allocation4], 1
    %s742 = scalar_lea.sflag [#allocation4], 1
    %743 = vsyncpa %s742, 1
    %744 = vsyncpa [#allocation7], 1
    %745 = vsyncpa [#allocation5], 1
    %s746 = scalar_lea.sflag [#allocation5], 1
    %747 = vsyncpa %s746, 1

</llo_original>
